<compile_context>
chip_gen: v7x
topology: tpu7x:2x2x1
jax: 0.10.0
libtpu: 0.0.40
codegen_flags: <defaults>
</compile_context>

<pallas_src>
import jax
import jax.numpy as jnp
import numpy as np
from jax.experimental import pallas as pl
from jax.experimental.pallas import tpu as pltpu

# ----------------------------- hyper-parameters -----------------------------
VOCAB = 50
EMBED = 16                      # embed_size['statement']
OUT_CHANNELS = 128
KERNELS = (3, 4, 5)
FNN_LAYER = 64
OUTPUT_SIZE = 6
BN_EPS = 1e-5

KMAX = max(KERNELS)
C3 = len(KERNELS) * OUT_CHANNELS                    # 384
KK = KMAX * EMBED                                   # im2col feature width (80)
KK_PAD = -(-KK // 128) * 128                        # contraction padded to lane width (128)
VOCAB_PAD = -(-VOCAB // 128) * 128                  # 128
FNN_PAD = -(-FNN_LAYER // 128) * 128                # 128
OUT_PAD = -(-OUTPUT_SIZE // 128) * 128              # 128


# ----------------------------- Pallas kernel -----------------------------

def _cnn_forward_kernel(tok_ref, emb_ref, wc_ref, bc_ref, mask_ref,
                        wf_ref, bf_ref, wl_ref, bl_ref, o_ref, xcol_scr):
    """Fully fused TextCNN forward (embedding -> 3 convs -> pool -> fnn -> label)."""
    B = o_ref.shape[0]
    R = tok_ref.shape[0]                             # B * S token rows (b-major)
    S = R // B
    vocab_pad, embed = emb_ref.shape
    l_pad = mask_ref.shape[0] // B                   # sublane-aligned time window

    # ---- embedding lookup as an exact one-hot @ table matmul on the MXU ----
    lane_ids = jax.lax.broadcasted_iota(jnp.int32, (R, vocab_pad), 1)
    onehot = (lane_ids == tok_ref[...]).astype(jnp.float32)          # (B*S, 128)
    emb = jnp.dot(onehot, emb_ref[...],
                  preferred_element_type=jnp.float32)                # (B*S, E)

    # ---- im2col slab assembly in VMEM (static slices) ----
    # Row r = b*l_pad + t; slot d occupies lanes [d*E, (d+1)*E) and holds the embedding
    # of token s = t - (KMAX-1) + d (zero for out-of-range / padding positions).
    xcol_scr[...] = jnp.zeros_like(xcol_scr)
    for b in range(B):
        emb_b = emb[b * S:(b + 1) * S, :]                            # (S, E)
        for d in range(KMAX):
            t0 = KMAX - 1 - d
            xcol_scr[pl.ds(b * l_pad + t0, S), pl.ds(d * embed, embed)] = emb_b

    # ---- all three convolutions for the whole batch: one batched MXU matmul ----
    y = jnp.dot(xcol_scr[...], wc_ref[...],
                preferred_element_type=jnp.float32)                  # (B*l_pad, 3C)
    # relu + validity mask (mask is 0/1; safe because relu >= 0 and every channel
    # group has at least one valid time position).
    y = jnp.maximum(y + bc_ref[...], 0.0) * mask_ref[...]

    # ---- global max-pool over time per sample (aligned slices, no scratch hop) ----
    pooled = jnp.concatenate(
        [jnp.max(y[b * l_pad:(b + 1) * l_pad, :], axis=0, keepdims=True)
         for b in range(B)],
        axis=0)                                                      # (B, 3C)

    # ---- fnn (+ folded bn1) -> relu -> label (+ folded bn2); dropouts identity ----
    h = jnp.dot(pooled, wf_ref[...], preferred_element_type=jnp.float32) + bf_ref[...]
    h = jnp.maximum(h, 0.0)
    o_ref[...] = jnp.dot(h, wl_ref[...], preferred_element_type=jnp.float32) + bl_ref[...]


# ----------------------------- wrapper -----------------------------

def forward(folded, statement):
    """statement: (S, B) int32 token ids (module layout; the module does statement.T).
    The other CNN_Statement.forward arguments are unused by the module."""
    S, B = statement.shape
    L_max = S + KMAX - 1
    l_pad = -(-L_max // 8) * 8                       # sublane-aligned time window (12 -> 16)

    # b-major token column (one tiny transpose+reshape; the gather itself is in-kernel)
    tokens = statement.T.reshape(B * S, 1)

    # conv-output validity mask, fixed at trace time (compile-time constant under jit):
    # row r = b*l_pad + t is valid for column group with kernel k iff t < S + k - 1.
    t_of_row = np.arange(l_pad * B) % l_pad
    k_of_col = np.repeat(np.asarray(KERNELS, np.int32), OUT_CHANNELS)
    mask = jnp.asarray(
        (t_of_row[:, None] < (S - 1 + k_of_col)[None, :]).astype(np.float32))

    vmem = pl.BlockSpec(memory_space=pltpu.MemorySpace.VMEM)
    out = pl.pallas_call(
        _cnn_forward_kernel,
        out_shape=jax.ShapeDtypeStruct((B, OUT_PAD), jnp.float32),
        in_specs=[vmem] * 9,
        out_specs=vmem,
        scratch_shapes=[pltpu.VMEM((l_pad * B, KK_PAD), jnp.float32)],
    )(tokens, folded['embedding'], folded['w_conv'], folded['b_conv'], mask,
      folded['w_fnn'], folded['b_fnn'], folded['w_label'], folded['b_label'])
    return out[:, :OUTPUT_SIZE]


# ----------------------------- parameter prep (outside hot path) -----------------------------

def _fold_bn(bn):
    scale = bn['gamma'] * jax.lax.rsqrt(bn['var'] + BN_EPS)
    shift = bn['beta'] - bn['mean'] * scale
    return scale, shift


def fold_params(p):
    """Fuse the three conv weights into one (128, 3C) matrix, fold eval-mode bn1/bn2
    into the FNN/label weights, pre-transpose all dense weights, and zero-pad the
    narrow dims (vocab->128, fnn 64->128, label 6->128) for lane-dense matmuls."""
    C = OUT_CHANNELS
    cols = []
    for i, k in enumerate(KERNELS):
        w = p[f'conv{i + 1}']['w'][:, 0]                        # (C, k, E)
        # Front-pad the window axis so a unified KMAX-window at position t reproduces
        # the original padded conv's output at position t.
        w = jnp.pad(w, ((0, 0), (KMAX - k, 0), (0, 0)))         # (C, KMAX, E)
        cols.append(w.reshape(C, KK).T)                         # (KK, C)
    w_conv = jnp.concatenate(cols, axis=1)                      # (KK, 3C)
    w_conv = jnp.pad(w_conv, ((0, KK_PAD - KK), (0, 0)))        # (128, 3C)
    b_conv = jnp.concatenate(
        [p[f'conv{i + 1}']['b'] for i in range(len(KERNELS))]).reshape(1, C3)

    # Eval-mode BN folds (exact): bn1 -> fnn, bn2 -> label.
    s1, t1 = _fold_bn(p['bn1'])                                 # (3C,)
    s2, t2 = _fold_bn(p['bn2'])                                 # (FNN,)
    wf = p['fnn']['w'].T                                        # (3C, FNN)
    bf = t1 @ wf + p['fnn']['b']                                # (FNN,)
    wf = s1[:, None] * wf
    wl = p['label']['w'].T                                      # (FNN, OUT)
    bl = t2 @ wl + p['label']['b']                              # (OUT,)
    wl = s2[:, None] * wl

    # Lane-dense zero padding.
    wf = jnp.pad(wf, ((0, 0), (0, FNN_PAD - FNN_LAYER)))        # (3C, 128)
    bf = jnp.pad(bf, (0, FNN_PAD - FNN_LAYER)).reshape(1, FNN_PAD)
    wl = jnp.pad(wl, ((0, FNN_PAD - FNN_LAYER), (0, OUT_PAD - OUTPUT_SIZE)))   # (128, 128)
    bl = jnp.pad(bl, (0, OUT_PAD - OUTPUT_SIZE)).reshape(1, OUT_PAD)
    emb = jnp.pad(p['embedding'], ((0, VOCAB_PAD - VOCAB), (0, 0)))            # (128, E)

    return dict(embedding=emb, w_conv=w_conv, b_conv=b_conv,
                w_fnn=wf, b_fnn=bf, w_label=wl, b_label=bl)


# ----------------------------- deterministic init -----------------------------

def _uniform(key, shape, scale):
    return jax.random.uniform(key, shape, jnp.float32, -scale, scale)


def init_linear(key, in_f, out_f):
    k0, k1 = jax.random.split(key)
    s = 1.0 / (in_f ** 0.5)
    return dict(w=_uniform(k0, (out_f, in_f), s), b=_uniform(k1, (out_f,), s))


def init_bn(key, c):
    k0, k1, k2, k3 = jax.random.split(key, 4)
    return dict(gamma=1.0 + 0.1 * jax.random.normal(k0, (c,), jnp.float32),
                beta=0.1 * jax.random.normal(k1, (c,), jnp.float32),
                mean=0.1 * jax.random.normal(k2, (c,), jnp.float32),
                var=1.0 + 0.1 * jax.random.uniform(k3, (c,), jnp.float32))


def init_params(key):
    keys = iter(jax.random.split(key, 16))
    p = {'embedding': 0.1 * jax.random.normal(next(keys), (VOCAB, EMBED), jnp.float32)}
    for i, k in enumerate(KERNELS):
        s = 1.0 / ((k * EMBED) ** 0.5)
        k0, k1 = jax.random.split(next(keys))
        p[f'conv{i + 1}'] = dict(w=_uniform(k0, (OUT_CHANNELS, 1, k, EMBED), s),
                                 b=_uniform(k1, (OUT_CHANNELS,), s))
    p['bn1'] = init_bn(next(keys), C3)
    p['fnn'] = init_linear(next(keys), C3, FNN_LAYER)
    p['bn2'] = init_bn(next(keys), FNN_LAYER)
    p['label'] = init_linear(next(keys), FNN_LAYER, OUTPUT_SIZE)
    return p


# ----------------------------- pure-JAX reference (independent path) -----------------------------

def reference_forward(params, statement):
    x = jnp.take(params['embedding'], statement.T, axis=0)      # (B, S, E)
    _, S, _ = x.shape
    maxes = []
    for i, k in enumerate(KERNELS):
        w = params[f'conv{i + 1}']['w'][:, 0]                   # (C, k, E)
        bias = params[f'conv{i + 1}']['b']
        xp = jnp.pad(x, ((0, 0), (k - 1, k - 1), (0, 0)))
        L = S + k - 1
        y = sum(jnp.einsum('ble,ce->blc', xp[:, dt:dt + L, :], w[:, dt, :])
                for dt in range(k)) + bias                      # (B, L, C)
        y = jnp.maximum(y, 0.0)
        maxes.append(jnp.max(y, axis=1))                        # (B, C)
    all_out = jnp.concatenate(maxes, axis=1)                    # (B, 3C)
    bn = params['bn1']
    all_out = ((all_out - bn['mean']) * jax.lax.rsqrt(bn['var'] + BN_EPS)
               * bn['gamma'] + bn['beta'])
    h = all_out @ params['fnn']['w'].T + params['fnn']['b']
    h = jnp.maximum(h, 0.0)
    bn = params['bn2']
    h = (h - bn['mean']) * jax.lax.rsqrt(bn['var'] + BN_EPS) * bn['gamma'] + bn['beta']
    return h @ params['label']['w'].T + params['label']['b']


# ----------------------------- main -----------------------------

if __name__ == "__main__":
    key = jax.random.PRNGKey(0)
    pkey, ikey = jax.random.split(key)
    params = init_params(pkey)
    folded = fold_params(params)

    S, B = 8, 2
    statement = jax.random.randint(ikey, (S, B), 0, VOCAB, dtype=jnp.int32)

    out = jax.jit(forward)(folded, statement)
    out = jax.block_until_ready(out)
    assert out.shape == (B, OUTPUT_SIZE), out.shape
    assert out.dtype == jnp.float32

    ref = reference_forward(params, statement)
    np.testing.assert_allclose(np.asarray(out), np.asarray(ref), rtol=2e-2, atol=3e-3)
    print("KERNEL_OK")
</pallas_src>

<mosaic_0001>
module attributes {stable_mosaic.version = 11 : i64} {
  func.func @_cnn_forward_kernel(%arg0: memref<16x1xi32, #tpu.memory_space<vmem>>, %arg1: memref<128x16xf32, #tpu.memory_space<vmem>>, %arg2: memref<128x384xf32, #tpu.memory_space<vmem>>, %arg3: memref<1x384xf32, #tpu.memory_space<vmem>>, %arg4: memref<32x384xf32, #tpu.memory_space<vmem>>, %arg5: memref<384x128xf32, #tpu.memory_space<vmem>>, %arg6: memref<1x128xf32, #tpu.memory_space<vmem>>, %arg7: memref<128x128xf32, #tpu.memory_space<vmem>>, %arg8: memref<1x128xf32, #tpu.memory_space<vmem>>, %arg9: memref<2x128xf32, #tpu.memory_space<vmem>>, %arg10: memref<32x128xf32, #tpu.memory_space<vmem>>) attributes {dimension_semantics = [], scalar_prefetch = 0 : i64, scratch_operands = 1 : i64, tpu.core_type = #tpu.core_type<tc>} {
    %0 = tpu.iota {dimensions = array<i32: 1>} : vector<16x128xi32>
    %c0 = arith.constant 0 : index
    %c0_0 = arith.constant 0 : index
    %1 = vector.load %arg0[%c0, %c0_0] : memref<16x1xi32, #tpu.memory_space<vmem>>, vector<16x1xi32>
    %2 = vector.broadcast %1 : vector<16x1xi32> to vector<16x128xi32>
    %3 = arith.cmpi eq, %0, %2 : vector<16x128xi32>
    %4 = arith.extui %3 : vector<16x128xi1> to vector<16x128xi32>
    %5 = arith.sitofp %4 : vector<16x128xi32> to vector<16x128xf32>
    %c0_1 = arith.constant 0 : index
    %c0_2 = arith.constant 0 : index
    %6 = vector.load %arg1[%c0_1, %c0_2] : memref<128x16xf32, #tpu.memory_space<vmem>>, vector<128x16xf32>
    %cst = arith.constant dense<0.000000e+00> : vector<16x16xf32>
    %7 = tpu.matmul %5, %6, %cst {dimension_numbers = #tpu.dot_dimension_numbers<[1], [0], [0], [1], [0, 0, 1, 1], [], []>} : vector<16x128xf32>, vector<128x16xf32>, vector<16x16xf32> -> vector<16x16xf32>
    %cst_3 = arith.constant 0.000000e+00 : f32
    %8 = vector.broadcast %cst_3 : f32 to vector<32x128xf32>
    %c0_4 = arith.constant 0 : index
    %c0_5 = arith.constant 0 : index
    %9 = vector.load %arg10[%c0_4, %c0_5] : memref<32x128xf32, #tpu.memory_space<vmem>>, vector<32x128xf32>
    tpu.vector_store %arg10[%c0_4, %c0_5], %8 {strides = array<i32>} : memref<32x128xf32, #tpu.memory_space<vmem>>, vector<32x128xf32>,
    %10 = vector.extract_strided_slice %7 {offsets = [0, 0], sizes = [8, 16], strides = [1, 1]} : vector<16x16xf32> to vector<8x16xf32>
    %c4 = arith.constant 4 : index
    %c0_6 = arith.constant 0 : index
    %11 = vector.load %arg10[%c4, %c0_6] : memref<32x128xf32, #tpu.memory_space<vmem>>, vector<8x16xf32>
    tpu.vector_store %arg10[%c4, %c0_6], %10 {strides = array<i32>} : memref<32x128xf32, #tpu.memory_space<vmem>>, vector<8x16xf32>,
    %c3 = arith.constant 3 : index
    %c16 = arith.constant 16 : index
    %12 = vector.load %arg10[%c3, %c16] : memref<32x128xf32, #tpu.memory_space<vmem>>, vector<8x16xf32>
    tpu.vector_store %arg10[%c3, %c16], %10 {strides = array<i32>} : memref<32x128xf32, #tpu.memory_space<vmem>>, vector<8x16xf32>,
    %c2 = arith.constant 2 : index
    %c32 = arith.constant 32 : index
    %13 = vector.load %arg10[%c2, %c32] : memref<32x128xf32, #tpu.memory_space<vmem>>, vector<8x16xf32>
    tpu.vector_store %arg10[%c2, %c32], %10 {strides = array<i32>} : memref<32x128xf32, #tpu.memory_space<vmem>>, vector<8x16xf32>,
    %c1 = arith.constant 1 : index
    %c48 = arith.constant 48 : index
    %14 = vector.load %arg10[%c1, %c48] : memref<32x128xf32, #tpu.memory_space<vmem>>, vector<8x16xf32>
    tpu.vector_store %arg10[%c1, %c48], %10 {strides = array<i32>} : memref<32x128xf32, #tpu.memory_space<vmem>>, vector<8x16xf32>,
    %c0_7 = arith.constant 0 : index
    %c64 = arith.constant 64 : index
    %15 = vector.load %arg10[%c0_7, %c64] : memref<32x128xf32, #tpu.memory_space<vmem>>, vector<8x16xf32>
    tpu.vector_store %arg10[%c0_7, %c64], %10 {strides = array<i32>} : memref<32x128xf32, #tpu.memory_space<vmem>>, vector<8x16xf32>,
    %16 = vector.extract_strided_slice %7 {offsets = [8, 0], sizes = [8, 16], strides = [1, 1]} : vector<16x16xf32> to vector<8x16xf32>
    %c20 = arith.constant 20 : index
    %c0_8 = arith.constant 0 : index
    %17 = vector.load %arg10[%c20, %c0_8] : memref<32x128xf32, #tpu.memory_space<vmem>>, vector<8x16xf32>
    tpu.vector_store %arg10[%c20, %c0_8], %16 {strides = array<i32>} : memref<32x128xf32, #tpu.memory_space<vmem>>, vector<8x16xf32>,
    %c19 = arith.constant 19 : index
    %c16_9 = arith.constant 16 : index
    %18 = vector.load %arg10[%c19, %c16_9] : memref<32x128xf32, #tpu.memory_space<vmem>>, vector<8x16xf32>
    tpu.vector_store %arg10[%c19, %c16_9], %16 {strides = array<i32>} : memref<32x128xf32, #tpu.memory_space<vmem>>, vector<8x16xf32>,
    %c18 = arith.constant 18 : index
    %c32_10 = arith.constant 32 : index
    %19 = vector.load %arg10[%c18, %c32_10] : memref<32x128xf32, #tpu.memory_space<vmem>>, vector<8x16xf32>
    tpu.vector_store %arg10[%c18, %c32_10], %16 {strides = array<i32>} : memref<32x128xf32, #tpu.memory_space<vmem>>, vector<8x16xf32>,
    %c17 = arith.constant 17 : index
    %c48_11 = arith.constant 48 : index
    %20 = vector.load %arg10[%c17, %c48_11] : memref<32x128xf32, #tpu.memory_space<vmem>>, vector<8x16xf32>
    tpu.vector_store %arg10[%c17, %c48_11], %16 {strides = array<i32>} : memref<32x128xf32, #tpu.memory_space<vmem>>, vector<8x16xf32>,
    %c16_12 = arith.constant 16 : index
    %c64_13 = arith.constant 64 : index
    %21 = vector.load %arg10[%c16_12, %c64_13] : memref<32x128xf32, #tpu.memory_space<vmem>>, vector<8x16xf32>
    tpu.vector_store %arg10[%c16_12, %c64_13], %16 {strides = array<i32>} : memref<32x128xf32, #tpu.memory_space<vmem>>, vector<8x16xf32>,
    %c0_14 = arith.constant 0 : index
    %c0_15 = arith.constant 0 : index
    %22 = vector.load %arg10[%c0_14, %c0_15] : memref<32x128xf32, #tpu.memory_space<vmem>>, vector<32x128xf32>
    %c0_16 = arith.constant 0 : index
    %c0_17 = arith.constant 0 : index
    %23 = vector.load %arg2[%c0_16, %c0_17] : memref<128x384xf32, #tpu.memory_space<vmem>>, vector<128x384xf32>
    %cst_18 = arith.constant dense<0.000000e+00> : vector<32x384xf32>
    %24 = tpu.matmul %22, %23, %cst_18 {dimension_numbers = #tpu.dot_dimension_numbers<[1], [0], [0], [1], [0, 0, 1, 1], [], []>} : vector<32x128xf32>, vector<128x384xf32>, vector<32x384xf32> -> vector<32x384xf32>
    %c0_19 = arith.constant 0 : index
    %c0_20 = arith.constant 0 : index
    %25 = vector.load %arg3[%c0_19, %c0_20] : memref<1x384xf32, #tpu.memory_space<vmem>>, vector<1x384xf32>
    %26 = vector.broadcast %25 : vector<1x384xf32> to vector<32x384xf32>
    %27 = arith.addf %24, %26 : vector<32x384xf32>
    %cst_21 = arith.constant 0.000000e+00 : f32
    %28 = vector.broadcast %cst_21 : f32 to vector<32x384xf32>
    %29 = arith.maximumf %27, %28 : vector<32x384xf32>
    %c0_22 = arith.constant 0 : index
    %c0_23 = arith.constant 0 : index
    %30 = vector.load %arg4[%c0_22, %c0_23] : memref<32x384xf32, #tpu.memory_space<vmem>>, vector<32x384xf32>
    %31 = arith.mulf %29, %30 : vector<32x384xf32>
    %32 = vector.extract_strided_slice %31 {offsets = [0, 0], sizes = [16, 384], strides = [1, 1]} : vector<32x384xf32> to vector<16x384xf32>
    %cst_24 = arith.constant dense<0xFF800000> : vector<384xf32>
    %33 = vector.multi_reduction <maximumf>, %32, %cst_24 [0] : vector<16x384xf32> to vector<384xf32>
    %34 = vector.shape_cast %33 : vector<384xf32> to vector<1x384xf32>
    %35 = vector.extract_strided_slice %31 {offsets = [16, 0], sizes = [16, 384], strides = [1, 1]} : vector<32x384xf32> to vector<16x384xf32>
    %cst_25 = arith.constant dense<0xFF800000> : vector<384xf32>
    %36 = vector.multi_reduction <maximumf>, %35, %cst_25 [0] : vector<16x384xf32> to vector<384xf32>
    %37 = vector.shape_cast %36 : vector<384xf32> to vector<1x384xf32>
    %38 = tpu.concatenate %34, %37 in 0 : vector<1x384xf32>, vector<1x384xf32> -> vector<2x384xf32>
    %c0_26 = arith.constant 0 : index
    %c0_27 = arith.constant 0 : index
    %39 = vector.load %arg5[%c0_26, %c0_27] : memref<384x128xf32, #tpu.memory_space<vmem>>, vector<384x128xf32>
    %cst_28 = arith.constant dense<0.000000e+00> : vector<2x128xf32>
    %40 = tpu.matmul %38, %39, %cst_28 {dimension_numbers = #tpu.dot_dimension_numbers<[1], [0], [0], [1], [0, 0, 1, 1], [], []>} : vector<2x384xf32>, vector<384x128xf32>, vector<2x128xf32> -> vector<2x128xf32>
    %c0_29 = arith.constant 0 : index
    %c0_30 = arith.constant 0 : index
    %41 = vector.load %arg6[%c0_29, %c0_30] : memref<1x128xf32, #tpu.memory_space<vmem>>, vector<1x128xf32>
    %42 = vector.broadcast %41 : vector<1x128xf32> to vector<2x128xf32>
    %43 = arith.addf %40, %42 : vector<2x128xf32>
    %cst_31 = arith.constant 0.000000e+00 : f32
    %44 = vector.broadcast %cst_31 : f32 to vector<2x128xf32>
    %45 = arith.maximumf %43, %44 : vector<2x128xf32>
    %c0_32 = arith.constant 0 : index
    %c0_33 = arith.constant 0 : index
    %46 = vector.load %arg7[%c0_32, %c0_33] : memref<128x128xf32, #tpu.memory_space<vmem>>, vector<128x128xf32>
    %cst_34 = arith.constant dense<0.000000e+00> : vector<2x128xf32>
    %47 = tpu.matmul %45, %46, %cst_34 {dimension_numbers = #tpu.dot_dimension_numbers<[1], [0], [0], [1], [0, 0, 1, 1], [], []>} : vector<2x128xf32>, vector<128x128xf32>, vector<2x128xf32> -> vector<2x128xf32>
    %c0_35 = arith.constant 0 : index
    %c0_36 = arith.constant 0 : index
    %48 = vector.load %arg8[%c0_35, %c0_36] : memref<1x128xf32, #tpu.memory_space<vmem>>, vector<1x128xf32>
    %49 = vector.broadcast %48 : vector<1x128xf32> to vector<2x128xf32>
    %50 = arith.addf %47, %49 : vector<2x128xf32>
    %c0_37 = arith.constant 0 : index
    %c0_38 = arith.constant 0 : index
    %51 = vector.load %arg9[%c0_37, %c0_38] : memref<2x128xf32, #tpu.memory_space<vmem>>, vector<2x128xf32>
    tpu.vector_store %arg9[%c0_37, %c0_38], %50 {strides = array<i32>} : memref<2x128xf32, #tpu.memory_space<vmem>>, vector<2x128xf32>,
    return
  }
}

</mosaic_0001>

<llo_original>
// kernel: forward.1
$region0: #{forward.1}
  #allocation0 [shape = 'u32[]', space=smem, size = 0x4, offset = 0x4, fixed_abs, tag = 'smem constant byte address 0x4 - core index']
  #allocation1 [shape = 'u32[144,128]{1,0:T(1,128)}', space=vmem, size = 0x12000, scoped, tag = 'internal scratch']
  #allocation2 [shape = 'f32[32,128]{1,0:T(8,128)}', space=vmem, size = 0x4000, scoped, tag = 'scratch operand']
  %s0 = inlined_call_operand.vmem [shape: s32[16,1], index: 0, kind: input, shape index: {}]
  %s1 = inlined_call_operand.vmem [shape: f32[128,16], index: 1, kind: input, shape index: {}]
  %s2 = inlined_call_operand.hbm [shape: f32[128,384], index: 2, kind: input, shape index: {}]
  %s3 = inlined_call_operand.vmem [shape: f32[1,384], index: 3, kind: input, shape index: {}]
  %s4 = inlined_call_operand.hbm [shape: f32[32,384], index: 4, kind: input, shape index: {}]
  %s5 = inlined_call_operand.hbm [shape: f32[384,128], index: 5, kind: input, shape index: {}]
  %s6 = inlined_call_operand.vmem [shape: f32[1,128], index: 6, kind: input, shape index: {}]
  %s7 = inlined_call_operand.vmem [shape: f32[128,128], index: 7, kind: input, shape index: {}]
  %s8 = inlined_call_operand.vmem [shape: f32[1,128], index: 8, kind: input, shape index: {}]
  %s9 = inlined_call_operand.hbm [shape: f32[2,128], index: 9, kind: output, shape index: {}]
  %s10 = sld [smem:[#allocation0]]
  $region58: #{forward.1} parent=0
    _
  %s12 = ssub.s32 1, %s10
  %s13 = scalar_select 0, %s12, %s10
  $region1: #{forward.1} parent=0
    #allocation3 [shape = 'u8[196608]{0}', space=vmem, size = 0x30000, scoped, tag = 'input window, operand 2, single buffered']
    #allocation4 [shape = 's32[1]{0}', space=sflag, size = 0x4, scoped, tag = 'scoped memory for forward.1']
    #allocation5 [shape = 's32[1]{0}', space=sflag, size = 0x4, scoped, tag = 'scoped memory for forward.1']
    #allocation6 [shape = 'u8[49152]{0}', space=vmem, size = 0xc000, scoped, tag = 'input window, operand 4, single buffered']
    #allocation7 [shape = 's32[1]{0}', space=sflag, size = 0x4, scoped, tag = 'scoped memory for forward.1']
    #allocation8 [shape = 'u8[196608]{0}', space=vmem, size = 0x30000, scoped, tag = 'input window, operand 5, single buffered']
    #allocation9 [shape = 'u8[1024]{0}', space=vmem, size = 0x400, scoped, tag = 'output window, operand 0, single buffered']
    %14 = vsyncpa [#allocation4], 0
    %15 = vsyncpa [#allocation7], 0
    %16 = vsyncpa [#allocation5], 0
    // Predicated region
    $region2: #{forward.1} parent=1 // pred_check
      _
    $region3: #{forward.1} parent=1 // pred_check_branch
      %18 = sbr.rel (0) target = $region5
    $region4: #{forward.1} parent=1 // pred_region
      _
    $region5: #{forward.1} parent=1 // pred_fallthru
      _
    // Predicated region
    $region6: #{forward.1} parent=1 // pred_check
      _
    $region7: #{forward.1} parent=1 // pred_check_branch
      %20 = sbr.rel (0) target = $region9
    $region8: #{forward.1} parent=1 // pred_region
      _
    $region9: #{forward.1} parent=1 // pred_fallthru
      _
    // Predicated region
    $region10: #{forward.1} parent=1 // pred_check
      _
    $region11: #{forward.1} parent=1 // pred_check_branch
      %22 = sbr.rel (0) target = $region13
    $region12: #{forward.1} parent=1 // pred_region
      %s24 = ssub.s32 6144, 6144
      %25 = vsyncadd [#allocation4], %s24
      %s26 = sshll.u32 [#allocation3], 4
      %s27 = int_to_ptr.vmem [resolvable:$true] %s26
      %32 = dma.hbm_to_vmem [thread:$0]  %s2, 6144, %s27, [#allocation4], 384, 384, 24
    $region13: #{forward.1} parent=1 // pred_fallthru
      _
    // Predicated region
    $region14: #{forward.1} parent=1 // pred_check
      _
    $region15: #{forward.1} parent=1 // pred_check_branch
      %34 = sbr.rel (0) target = $region17
    $region16: #{forward.1} parent=1 // pred_region
      _
    $region17: #{forward.1} parent=1 // pred_fallthru
      _
    // Predicated region
    $region18: #{forward.1} parent=1 // pred_check
      _
    $region19: #{forward.1} parent=1 // pred_check_branch
      %36 = sbr.rel (0) target = $region21
    $region20: #{forward.1} parent=1 // pred_region
      %s38 = ssub.s32 1536, 1536
      %39 = vsyncadd [#allocation7], %s38
      %s40 = sshll.u32 [#allocation6], 4
      %s41 = int_to_ptr.vmem [resolvable:$true] %s40
      %46 = dma.hbm_to_vmem [thread:$0]  %s4, 1536, %s41, [#allocation7], 384, 384, 24
    $region21: #{forward.1} parent=1 // pred_fallthru
      _
    // Predicated region
    $region22: #{forward.1} parent=1 // pred_check
      _
    $region23: #{forward.1} parent=1 // pred_check_branch
      %48 = sbr.rel (0) target = $region25
    $region24: #{forward.1} parent=1 // pred_region
      %s50 = ssub.s32 6144, 6144
      %51 = vsyncadd [#allocation7], %s50
      %s52 = sshll.u32 [#allocation8], 4
      %s53 = int_to_ptr.vmem [resolvable:$true] %s52
      %58 = dma.hbm_to_vmem [thread:$0]  %s5, 6144, %s53, [#allocation7], 128, 128, 8
    $region25: #{forward.1} parent=1 // pred_fallthru
      _
    // Predicated region
    $region26: #{forward.1} parent=1 // pred_check
      _
    $region27: #{forward.1} parent=1 // pred_check_branch
      %60 = sbr.rel (0) target = $region29
    $region28: #{forward.1} parent=1 // pred_region
      _
    $region29: #{forward.1} parent=1 // pred_fallthru
      _
    // Predicated region
    $region30: #{forward.1} parent=1 // pred_check
      _
    $region31: #{forward.1} parent=1 // pred_check_branch
      %62 = sbr.rel (0) target = $region33
    $region32: #{forward.1} parent=1 // pred_region
      _
    $region33: #{forward.1} parent=1 // pred_fallthru
      _
    // Predicated region
    $region34: #{forward.1} parent=1 // pred_check
      _
    $region35: #{forward.1} parent=1 // pred_check_branch
      %64 = sbr.rel (0) target = $region37
    $region36: #{forward.1} parent=1 // pred_region
      _
    $region37: #{forward.1} parent=1 // pred_fallthru
      _
    // Predicated region
    $region38: #{forward.1} parent=1 // pred_check
      _
    $region39: #{forward.1} parent=1 // pred_check_branch
      %66 = sbr.rel (0) target = $region41
    $region40: #{forward.1} parent=1 // pred_region
      %67 = dma.done [#allocation4], 6144
    $region41: #{forward.1} parent=1 // pred_fallthru
      _
    // Predicated region
    $region42: #{forward.1} parent=1 // pred_check
      _
    $region43: #{forward.1} parent=1 // pred_check_branch
      %69 = sbr.rel (0) target = $region45
    $region44: #{forward.1} parent=1 // pred_region
      %70 = dma.done [#allocation7], 1536
    $region45: #{forward.1} parent=1 // pred_fallthru
      _
    // Predicated region
    $region46: #{forward.1} parent=1 // pred_check
      _
    $region47: #{forward.1} parent=1 // pred_check_branch
      %72 = sbr.rel (0) target = $region49
    $region48: #{forward.1} parent=1 // pred_region
      %73 = dma.done [#allocation7], 6144
    $region49: #{forward.1} parent=1 // pred_fallthru
      _
    %v74 = vlaneseq
    %v75 = vand.u32 %v74, 127
    %v76 = vld [vmem:[%s0] sm:$0xff]
    %v77 = vld [vmem:[%s0 + $0x8] sm:$0xff]
    %78 = vset.pattern.permute.xlu0 0
    %79 = vperm.xlu0 %78, %v76
    %v80 = vpop.permute.xlu0 %79
    %81 = vset.pattern.permute.xlu0 0
    %82 = vperm.xlu0 %81, %v77
    %v83 = vpop.permute.xlu0 %82
    %vm84 = vcmp.eq.s32.totalorder %v75, %v80
    %vm85 = vcmp.eq.s32.totalorder %v75, %v83
    %v86 = vsel %vm84, 1, 0
    %v87 = vsel %vm85, 1, 0
    %v88 = vcvt.s32.f32 %v86
    %v89 = vcvt.s32.f32 %v87
    %v90 = vld [vmem:[%s1] sm:$0xff]
    %v91 = vld [vmem:[%s1 + $0x8] sm:$0xff]
    %v92 = vld [vmem:[%s1 + $0x10] sm:$0xff]
    %v93 = vld [vmem:[%s1 + $0x18] sm:$0xff]
    %v94 = vld [vmem:[%s1 + $0x20] sm:$0xff]
    %v95 = vld [vmem:[%s1 + $0x28] sm:$0xff]
    %v96 = vld [vmem:[%s1 + $0x30] sm:$0xff]
    %v97 = vld [vmem:[%s1 + $0x38] sm:$0xff]
    %v98 = vld [vmem:[%s1 + $0x40] sm:$0xff]
    %v99 = vld [vmem:[%s1 + $0x48] sm:$0xff]
    %v100 = vld [vmem:[%s1 + $0x50] sm:$0xff]
    %v101 = vld [vmem:[%s1 + $0x58] sm:$0xff]
    %v102 = vld [vmem:[%s1 + $0x60] sm:$0xff]
    %v103 = vld [vmem:[%s1 + $0x68] sm:$0xff]
    %v104 = vld [vmem:[%s1 + $0x70] sm:$0xff]
    %v105 = vld [vmem:[%s1 + $0x78] sm:$0xff]
    %106 = vmatprep.subr.mxu0 0.0
    %107 = vmatpush1.msra.mxu0 %v90
    %108 = vmatprep.subr.mxu0 0.0
    %109 = vmatpush1.msra.mxu0 %v91
    %110 = vmatprep.subr.mxu0 0.0
    %111 = vmatpush1.msra.mxu0 %v92
    %112 = vmatprep.subr.mxu0 0.0
    %113 = vmatpush1.msra.mxu0 %v93
    %114 = vmatprep.subr.mxu0 0.0
    %115 = vmatpush1.msra.mxu0 %v94
    %116 = vmatprep.subr.mxu0 0.0
    %117 = vmatpush1.msra.mxu0 %v95
    %118 = vmatprep.subr.mxu0 0.0
    %119 = vmatpush1.msra.mxu0 %v96
    %120 = vmatprep.subr.mxu0 0.0
    %121 = vmatpush1.msra.mxu0 %v97
    %122 = vmatprep.subr.mxu0 0.0
    %123 = vmatpush1.msra.mxu0 %v98
    %124 = vmatprep.subr.mxu0 0.0
    %125 = vmatpush1.msra.mxu0 %v99
    %126 = vmatprep.subr.mxu0 0.0
    %127 = vmatpush1.msra.mxu0 %v100
    %128 = vmatprep.subr.mxu0 0.0
    %129 = vmatpush1.msra.mxu0 %v101
    %130 = vmatprep.subr.mxu0 0.0
    %131 = vmatpush1.msra.mxu0 %v102
    %132 = vmatprep.subr.mxu0 0.0
    %133 = vmatpush1.msra.mxu0 %v103
    %134 = vmatprep.subr.mxu0 0.0
    %135 = vmatpush1.msra.mxu0 %v104
    %136 = vmatprep.subr.mxu0 0.0
    %137 = vmatpush1.msra.mxu0 %v105
    %138 = vmatprep.subr.mxu0 0.0
    %139 = vmatpush1.msra.mxu0 0.0
    %140 = vmatprep.subr.mxu0 0.0
    %141 = vmatpush1.msra.mxu0 0.0
    %142 = vmatprep.subr.mxu0 0.0
    %143 = vmatpush1.msra.mxu0 0.0
    %144 = vmatprep.subr.mxu0 0.0
    %145 = vmatpush1.msra.mxu0 0.0
    %146 = vmatprep.subr.mxu0 0.0
    %147 = vmatpush1.msra.mxu0 0.0
    %148 = vmatprep.subr.mxu0 0.0
    %149 = vmatpush1.msra.mxu0 0.0
    %150 = vmatprep.subr.mxu0 0.0
    %151 = vmatpush1.msra.mxu0 0.0
    %152 = vmatprep.subr.mxu0 0.0
    %153 = vmatpush1.msra.mxu0 0.0
    %154 = vmatprep.subr.mxu0 0.0
    %155 = vmatpush1.msra.mxu0 0.0
    %156 = vmatprep.subr.mxu0 0.0
    %157 = vmatpush1.msra.mxu0 0.0
    %158 = vmatprep.subr.mxu0 0.0
    %159 = vmatpush1.msra.mxu0 0.0
    %160 = vmatprep.subr.mxu0 0.0
    %161 = vmatpush1.msra.mxu0 0.0
    %162 = vmatprep.subr.mxu0 0.0
    %163 = vmatpush1.msra.mxu0 0.0
    %164 = vmatprep.subr.mxu0 0.0
    %165 = vmatpush1.msra.mxu0 0.0
    %166 = vmatprep.subr.mxu0 0.0
    %167 = vmatpush1.msra.mxu0 0.0
    %168 = vmatprep.subr.mxu0 0.0
    %169 = vmatpush1.msra.mxu0 0.0
    %170 = vmatprep.mubr.f32.mxu0 0.0
    %171 = vmatmul.mubr.f32.gmra.mrb[0].mxu0 %v88
    %v172 = vpop.f32.mrb[0].mxu0
    %v173 = vadd.f32 0.0, %v172
    %v174 = vpop.f32.mrb[0].mxu0
    %175 = vmatprep.mubr.f32.mxu0 0.0
    %176 = vmatmul.mubr.f32.gmra.mrb[0].mxu0 %v89
    %v177 = vpop.f32.mrb[0].mxu0
    %v178 = vadd.f32 0.0, %v177
    %v179 = vpop.f32.mrb[0].mxu0
    %180 = vdwg.mxu0
    %181 = vst [vmem:[#allocation2] sm:$0xff] 0.0
    %182 = vst [vmem:[#allocation2 + $0x8] sm:$0xff] 0.0
    %183 = vst [vmem:[#allocation2 + $0x10] sm:$0xff] 0.0
    %184 = vst [vmem:[#allocation2 + $0x18] sm:$0xff] 0.0
    %vm185 = vcmask 130048
    %186 = vst.msk [vmem:[#allocation2 + $0x4] sm:$0xff] %vm185, %v173
    %188 = vrot.lane.b32.xlu0 %v173, 16
    %v189 = vpop.permute.xlu0 %188
    %vm191 = vcmask 261248
    %192 = vst.msk [vmem:[#allocation2 + $0x3] sm:$0xff] %vm191, %v189
    %193 = vrot.lane.b32.xlu0 %v173, 32
    %v194 = vpop.permute.xlu0 %193
    %vm196 = vcmask 392448
    %197 = vst.msk [vmem:[#allocation2 + $0x2] sm:$0xff] %vm196, %v194
    %198 = vrot.lane.b32.xlu0 %v173, 48
    %v199 = vpop.permute.xlu0 %198
    %vm201 = vcmask 523648
    %202 = vst.msk [vmem:[#allocation2 + $0x1] sm:$0xff] %vm201, %v199
    %203 = vrot.lane.b32.xlu0 %v173, 64
    %v204 = vpop.permute.xlu0 %203
    %vm206 = vcmask 654848
    %207 = vst.msk [vmem:[#allocation2] sm:$0xff] %vm206, %v204
    %208 = vst.msk [vmem:[#allocation2 + $0x14] sm:$0xff] %vm185, %v178
    %210 = vrot.lane.b32.xlu0 %v178, 16
    %v211 = vpop.permute.xlu0 %210
    %213 = vst.msk [vmem:[#allocation2 + $0x13] sm:$0xff] %vm191, %v211
    %214 = vrot.lane.b32.xlu0 %v178, 32
    %v215 = vpop.permute.xlu0 %214
    %217 = vst.msk [vmem:[#allocation2 + $0x12] sm:$0xff] %vm196, %v215
    %218 = vrot.lane.b32.xlu0 %v178, 48
    %v219 = vpop.permute.xlu0 %218
    %221 = vst.msk [vmem:[#allocation2 + $0x11] sm:$0xff] %vm201, %v219
    %222 = vrot.lane.b32.xlu0 %v178, 64
    %v223 = vpop.permute.xlu0 %222
    %225 = vst.msk [vmem:[#allocation2 + $0x10] sm:$0xff] %vm206, %v223
    %v226 = vld [vmem:[#allocation2] sm:$0xff]
    %v227 = vld [vmem:[#allocation2 + $0x8] sm:$0xff]
    %v228 = vld [vmem:[#allocation2 + $0x10] sm:$0xff]
    %v229 = vld [vmem:[#allocation2 + $0x18] sm:$0xff]
    %v230 = vld [vmem:[#allocation3] sm:$0xff]
    %v231 = vld [vmem:[#allocation3 + $0x8] sm:$0xff]
    %v232 = vld [vmem:[#allocation3 + $0x10] sm:$0xff]
    %v233 = vld [vmem:[#allocation3 + $0x18] sm:$0xff]
    %v234 = vld [vmem:[#allocation3 + $0x20] sm:$0xff]
    %v235 = vld [vmem:[#allocation3 + $0x28] sm:$0xff]
    %v236 = vld [vmem:[#allocation3 + $0x30] sm:$0xff]
    %v237 = vld [vmem:[#allocation3 + $0x38] sm:$0xff]
    %v238 = vld [vmem:[#allocation3 + $0x40] sm:$0xff]
    %v239 = vld [vmem:[#allocation3 + $0x48] sm:$0xff]
    %v240 = vld [vmem:[#allocation3 + $0x50] sm:$0xff]
    %v241 = vld [vmem:[#allocation3 + $0x58] sm:$0xff]
    %v242 = vld [vmem:[#allocation3 + $0x60] sm:$0xff]
    %v243 = vld [vmem:[#allocation3 + $0x68] sm:$0xff]
    %v244 = vld [vmem:[#allocation3 + $0x70] sm:$0xff]
    %v245 = vld [vmem:[#allocation3 + $0x78] sm:$0xff]
    %v246 = vld [vmem:[#allocation3 + $0x80] sm:$0xff]
    %v247 = vld [vmem:[#allocation3 + $0x88] sm:$0xff]
    %v248 = vld [vmem:[#allocation3 + $0x90] sm:$0xff]
    %v249 = vld [vmem:[#allocation3 + $0x98] sm:$0xff]
    %v250 = vld [vmem:[#allocation3 + $0xa0] sm:$0xff]
    %v251 = vld [vmem:[#allocation3 + $0xa8] sm:$0xff]
    %v252 = vld [vmem:[#allocation3 + $0xb0] sm:$0xff]
    %v253 = vld [vmem:[#allocation3 + $0xb8] sm:$0xff]
    %v254 = vld [vmem:[#allocation3 + $0xc0] sm:$0xff]
    %v255 = vld [vmem:[#allocation3 + $0xc8] sm:$0xff]
    %v256 = vld [vmem:[#allocation3 + $0xd0] sm:$0xff]
    %v257 = vld [vmem:[#allocation3 + $0xd8] sm:$0xff]
    %v258 = vld [vmem:[#allocation3 + $0xe0] sm:$0xff]
    %v259 = vld [vmem:[#allocation3 + $0xe8] sm:$0xff]
    %v260 = vld [vmem:[#allocation3 + $0xf0] sm:$0xff]
    %v261 = vld [vmem:[#allocation3 + $0xf8] sm:$0xff]
    %v262 = vld [vmem:[#allocation3 + $0x100] sm:$0xff]
    %v263 = vld [vmem:[#allocation3 + $0x108] sm:$0xff]
    %v264 = vld [vmem:[#allocation3 + $0x110] sm:$0xff]
    %v265 = vld [vmem:[#allocation3 + $0x118] sm:$0xff]
    %v266 = vld [vmem:[#allocation3 + $0x120] sm:$0xff]
    %v267 = vld [vmem:[#allocation3 + $0x128] sm:$0xff]
    %v268 = vld [vmem:[#allocation3 + $0x130] sm:$0xff]
    %v269 = vld [vmem:[#allocation3 + $0x138] sm:$0xff]
    %v270 = vld [vmem:[#allocation3 + $0x140] sm:$0xff]
    %v271 = vld [vmem:[#allocation3 + $0x148] sm:$0xff]
    %v272 = vld [vmem:[#allocation3 + $0x150] sm:$0xff]
    %v273 = vld [vmem:[#allocation3 + $0x158] sm:$0xff]
    %v274 = vld [vmem:[#allocation3 + $0x160] sm:$0xff]
    %v275 = vld [vmem:[#allocation3 + $0x168] sm:$0xff]
    %v276 = vld [vmem:[#allocation3 + $0x170] sm:$0xff]
    %v277 = vld [vmem:[#allocation3 + $0x178] sm:$0xff]
    %v278 = vld [vmem:[%s3] sm:$0x7]
    %v280 = vlaneseq
    %v281 = vshrl.u32 %v280, 7
    %v282 = vsub.s32 0, %v281
    %v283 = vrot.slane %v278, %v282
    %v284 = vlaneseq
    %v285 = vshrl.u32 %v284, 7
    %v286 = vsub.s32 1, %v285
    %v287 = vrot.slane %v278, %v286
    %v288 = vlaneseq
    %v289 = vshrl.u32 %v288, 7
    %v290 = vsub.s32 2, %v289
    %v291 = vrot.slane %v278, %v290
    %295 = vmatprep.subr.mxu0 %v231
    %296 = vmatpush1.msra.mxu0 %v230
    %297 = vmatprep.subr.mxu0 %v234
    %298 = vmatpush1.msra.mxu0 %v233
    %299 = vmatprep.subr.mxu0 %v237
    %300 = vmatpush1.msra.mxu0 %v236
    %301 = vmatprep.subr.mxu0 %v240
    %302 = vmatpush1.msra.mxu0 %v239
    %303 = vmatprep.subr.mxu0 %v243
    %304 = vmatpush1.msra.mxu0 %v242
    %305 = vmatprep.subr.mxu0 %v246
    %306 = vmatpush1.msra.mxu0 %v245
    %307 = vmatprep.subr.mxu0 %v249
    %308 = vmatpush1.msra.mxu0 %v248
    %309 = vmatprep.subr.mxu0 %v252
    %310 = vmatpush1.msra.mxu0 %v251
    %311 = vmatprep.subr.mxu0 %v255
    %312 = vmatpush1.msra.mxu0 %v254
    %313 = vmatprep.subr.mxu0 %v258
    %314 = vmatpush1.msra.mxu0 %v257
    %315 = vmatprep.subr.mxu0 %v261
    %316 = vmatpush1.msra.mxu0 %v260
    %317 = vmatprep.subr.mxu0 %v264
    %318 = vmatpush1.msra.mxu0 %v263
    %319 = vmatprep.subr.mxu0 %v267
    %320 = vmatpush1.msra.mxu0 %v266
    %321 = vmatprep.subr.mxu0 %v270
    %322 = vmatpush1.msra.mxu0 %v269
    %323 = vmatprep.subr.mxu0 %v273
    %324 = vmatpush1.msra.mxu0 %v272
    %325 = vmatprep.subr.mxu0 %v276
    %326 = vmatpush1.msra.mxu0 %v275
    %327 = vmatprep.subr.mxu0 0.0
    %328 = vmatpush1.msra.mxu0 0.0
    %329 = vmatprep.subr.mxu0 0.0
    %330 = vmatpush1.msra.mxu0 0.0
    %331 = vmatprep.subr.mxu0 0.0
    %332 = vmatpush1.msra.mxu0 0.0
    %333 = vmatprep.subr.mxu0 0.0
    %334 = vmatpush1.msra.mxu0 0.0
    %335 = vmatprep.subr.mxu0 0.0
    %336 = vmatpush1.msra.mxu0 0.0
    %337 = vmatprep.subr.mxu0 0.0
    %338 = vmatpush1.msra.mxu0 0.0
    %339 = vmatprep.subr.mxu0 0.0
    %340 = vmatpush1.msra.mxu0 0.0
    %341 = vmatprep.subr.mxu0 0.0
    %342 = vmatpush1.msra.mxu0 0.0
    %343 = vmatprep.subr.mxu0 0.0
    %344 = vmatpush1.msra.mxu0 0.0
    %345 = vmatprep.subr.mxu0 0.0
    %346 = vmatpush1.msra.mxu0 0.0
    %347 = vmatprep.subr.mxu0 0.0
    %348 = vmatpush1.msra.mxu0 0.0
    %349 = vmatprep.subr.mxu0 0.0
    %350 = vmatpush1.msra.mxu0 0.0
    %351 = vmatprep.subr.mxu0 0.0
    %352 = vmatpush1.msra.mxu0 0.0
    %353 = vmatprep.subr.mxu0 0.0
    %354 = vmatpush1.msra.mxu0 0.0
    %355 = vmatprep.subr.mxu0 0.0
    %356 = vmatpush1.msra.mxu0 0.0
    %357 = vmatprep.subr.mxu0 0.0
    %358 = vmatpush1.msra.mxu0 0.0
    %359 = vmatprep.mubr.f32.mxu0 0.0
    %360 = vmatmul.mubr.f32.gmra.mrb[0].mxu0 %v226
    %v361 = vpop.f32.mrb[0].mxu0
    %v362 = vadd.f32 %v283, %v361
    %v363 = vpop.f32.mrb[0].mxu0
    %v364 = vadd.f32 %v287, %v363
    %365 = vmatprep.mubr.f32.mxu0 0.0
    %366 = vmatmul.mubr.f32.gmra.mrb[0].mxu0 %v227
    %v367 = vpop.f32.mrb[0].mxu0
    %v368 = vadd.f32 %v283, %v367
    %v369 = vpop.f32.mrb[0].mxu0
    %v370 = vadd.f32 %v287, %v369
    %371 = vmatprep.mubr.f32.mxu0 0.0
    %372 = vmatmul.mubr.f32.gmra.mrb[0].mxu0 %v228
    %v373 = vpop.f32.mrb[0].mxu0
    %v374 = vadd.f32 %v283, %v373
    %v375 = vpop.f32.mrb[0].mxu0
    %v376 = vadd.f32 %v287, %v375
    %377 = vmatprep.mubr.f32.mxu0 0.0
    %378 = vmatmul.mubr.f32.gmra.mrb[0].mxu0 %v229
    %v379 = vpop.f32.mrb[0].mxu0
    %v380 = vadd.f32 %v283, %v379
    %v381 = vpop.f32.mrb[0].mxu0
    %v382 = vadd.f32 %v287, %v381
    %383 = vdwg.mxu0
    %384 = vmatprep.subr.mxu0 0.0
    %385 = vmatpush1.msra.mxu0 %v232
    %386 = vmatprep.subr.mxu0 0.0
    %387 = vmatpush1.msra.mxu0 %v235
    %388 = vmatprep.subr.mxu0 0.0
    %389 = vmatpush1.msra.mxu0 %v238
    %390 = vmatprep.subr.mxu0 0.0
    %391 = vmatpush1.msra.mxu0 %v241
    %392 = vmatprep.subr.mxu0 0.0
    %393 = vmatpush1.msra.mxu0 %v244
    %394 = vmatprep.subr.mxu0 0.0
    %395 = vmatpush1.msra.mxu0 %v247
    %396 = vmatprep.subr.mxu0 0.0
    %397 = vmatpush1.msra.mxu0 %v250
    %398 = vmatprep.subr.mxu0 0.0
    %399 = vmatpush1.msra.mxu0 %v253
    %400 = vmatprep.subr.mxu0 0.0
    %401 = vmatpush1.msra.mxu0 %v256
    %402 = vmatprep.subr.mxu0 0.0
    %403 = vmatpush1.msra.mxu0 %v259
    %404 = vmatprep.subr.mxu0 0.0
    %405 = vmatpush1.msra.mxu0 %v262
    %406 = vmatprep.subr.mxu0 0.0
    %407 = vmatpush1.msra.mxu0 %v265
    %408 = vmatprep.subr.mxu0 0.0
    %409 = vmatpush1.msra.mxu0 %v268
    %410 = vmatprep.subr.mxu0 0.0
    %411 = vmatpush1.msra.mxu0 %v271
    %412 = vmatprep.subr.mxu0 0.0
    %413 = vmatpush1.msra.mxu0 %v274
    %414 = vmatprep.subr.mxu0 0.0
    %415 = vmatpush1.msra.mxu0 %v277
    %416 = vmatprep.subr.mxu0 0.0
    %417 = vmatpush1.msra.mxu0 0.0
    %418 = vmatprep.subr.mxu0 0.0
    %419 = vmatpush1.msra.mxu0 0.0
    %420 = vmatprep.subr.mxu0 0.0
    %421 = vmatpush1.msra.mxu0 0.0
    %422 = vmatprep.subr.mxu0 0.0
    %423 = vmatpush1.msra.mxu0 0.0
    %424 = vmatprep.subr.mxu0 0.0
    %425 = vmatpush1.msra.mxu0 0.0
    %426 = vmatprep.subr.mxu0 0.0
    %427 = vmatpush1.msra.mxu0 0.0
    %428 = vmatprep.subr.mxu0 0.0
    %429 = vmatpush1.msra.mxu0 0.0
    %430 = vmatprep.subr.mxu0 0.0
    %431 = vmatpush1.msra.mxu0 0.0
    %432 = vmatprep.subr.mxu0 0.0
    %433 = vmatpush1.msra.mxu0 0.0
    %434 = vmatprep.subr.mxu0 0.0
    %435 = vmatpush1.msra.mxu0 0.0
    %436 = vmatprep.subr.mxu0 0.0
    %437 = vmatpush1.msra.mxu0 0.0
    %438 = vmatprep.subr.mxu0 0.0
    %439 = vmatpush1.msra.mxu0 0.0
    %440 = vmatprep.subr.mxu0 0.0
    %441 = vmatpush1.msra.mxu0 0.0
    %442 = vmatprep.subr.mxu0 0.0
    %443 = vmatpush1.msra.mxu0 0.0
    %444 = vmatprep.subr.mxu0 0.0
    %445 = vmatpush1.msra.mxu0 0.0
    %446 = vmatprep.subr.mxu0 0.0
    %447 = vmatpush1.msra.mxu0 0.0
    %448 = vmatprep.mubr.f32.mxu0 0.0
    %449 = vmatmul.mubr.f32.gmra.mrb[0].mxu0 %v226
    %v450 = vpop.f32.mrb[0].mxu0
    %v451 = vadd.f32 %v291, %v450
    %v452 = vpop.f32.mrb[0].mxu0
    %453 = vmatprep.mubr.f32.mxu0 0.0
    %454 = vmatmul.mubr.f32.gmra.mrb[0].mxu0 %v227
    %v455 = vpop.f32.mrb[0].mxu0
    %v456 = vadd.f32 %v291, %v455
    %v457 = vpop.f32.mrb[0].mxu0
    %458 = vmatprep.mubr.f32.mxu0 0.0
    %459 = vmatmul.mubr.f32.gmra.mrb[0].mxu0 %v228
    %v460 = vpop.f32.mrb[0].mxu0
    %v461 = vadd.f32 %v291, %v460
    %v462 = vpop.f32.mrb[0].mxu0
    %463 = vmatprep.mubr.f32.mxu0 0.0
    %464 = vmatmul.mubr.f32.gmra.mrb[0].mxu0 %v229
    %v465 = vpop.f32.mrb[0].mxu0
    %v466 = vadd.f32 %v291, %v465
    %v467 = vpop.f32.mrb[0].mxu0
    %468 = vdwg.mxu0
    %v469 = vmax.f32 %v362, 0.0
    %v470 = vmax.f32 %v364, 0.0
    %v471 = vmax.f32 %v451, 0.0
    %v472 = vmax.f32 %v368, 0.0
    %v473 = vmax.f32 %v370, 0.0
    %v474 = vmax.f32 %v456, 0.0
    %v475 = vmax.f32 %v374, 0.0
    %v476 = vmax.f32 %v376, 0.0
    %v477 = vmax.f32 %v461, 0.0
    %v478 = vmax.f32 %v380, 0.0
    %v479 = vmax.f32 %v382, 0.0
    %v480 = vmax.f32 %v466, 0.0
    %v481 = vld [vmem:[#allocation6] sm:$0xff]
    %v482 = vld [vmem:[#allocation6 + $0x8] sm:$0xff]
    %v483 = vld [vmem:[#allocation6 + $0x10] sm:$0xff]
    %v484 = vld [vmem:[#allocation6 + $0x18] sm:$0xff]
    %v485 = vld [vmem:[#allocation6 + $0x20] sm:$0xff]
    %v486 = vld [vmem:[#allocation6 + $0x28] sm:$0xff]
    %v487 = vld [vmem:[#allocation6 + $0x30] sm:$0xff]
    %v488 = vld [vmem:[#allocation6 + $0x38] sm:$0xff]
    %v489 = vld [vmem:[#allocation6 + $0x40] sm:$0xff]
    %v490 = vld [vmem:[#allocation6 + $0x48] sm:$0xff]
    %v491 = vld [vmem:[#allocation6 + $0x50] sm:$0xff]
    %v492 = vld [vmem:[#allocation6 + $0x58] sm:$0xff]
    %v493 = vmul.f32 %v469, %v481
    %v494 = vmul.f32 %v470, %v482
    %v495 = vmul.f32 %v471, %v483
    %v496 = vmul.f32 %v472, %v484
    %v497 = vmul.f32 %v473, %v485
    %v498 = vmul.f32 %v474, %v486
    %v499 = vmul.f32 %v475, %v487
    %v500 = vmul.f32 %v476, %v488
    %v501 = vmul.f32 %v477, %v489
    %v502 = vmul.f32 %v478, %v490
    %v503 = vmul.f32 %v479, %v491
    %v504 = vmul.f32 %v480, %v492
    %v505 = vmax.f32 %v493, %v496
    %v506 = vrot.slane %v505, 4
    %v507 = vmax.f32 %v505, %v506
    %v508 = vrot.slane %v507, 2
    %v509 = vmax.f32 %v507, %v508
    %v510 = vrot.slane %v509, 1
    %v511 = vmax.f32 %v509, %v510
    %v512 = vmax.f32 %v494, %v497
    %v513 = vrot.slane %v512, 4
    %v514 = vmax.f32 %v512, %v513
    %v515 = vrot.slane %v514, 2
    %v516 = vmax.f32 %v514, %v515
    %v517 = vrot.slane %v516, 1
    %v518 = vmax.f32 %v516, %v517
    %v519 = vmax.f32 %v495, %v498
    %v520 = vrot.slane %v519, 4
    %v521 = vmax.f32 %v519, %v520
    %v522 = vrot.slane %v521, 2
    %v523 = vmax.f32 %v521, %v522
    %v524 = vrot.slane %v523, 1
    %v525 = vmax.f32 %v523, %v524
    %v526 = vmax.f32 %v499, %v502
    %v527 = vrot.slane %v526, 4
    %v528 = vmax.f32 %v526, %v527
    %v529 = vrot.slane %v528, 2
    %v530 = vmax.f32 %v528, %v529
    %v531 = vrot.slane %v530, 1
    %v532 = vmax.f32 %v530, %v531
    %v533 = vmax.f32 %v500, %v503
    %v534 = vrot.slane %v533, 4
    %v535 = vmax.f32 %v533, %v534
    %v536 = vrot.slane %v535, 2
    %v537 = vmax.f32 %v535, %v536
    %v538 = vrot.slane %v537, 1
    %v539 = vmax.f32 %v537, %v538
    %v540 = vmax.f32 %v501, %v504
    %v541 = vrot.slane %v540, 4
    %v542 = vmax.f32 %v540, %v541
    %v543 = vrot.slane %v542, 2
    %v544 = vmax.f32 %v542, %v543
    %v545 = vrot.slane %v544, 1
    %v546 = vmax.f32 %v544, %v545
    %vm547 = vcmask 1040384
    %v548 = vsel %vm547, %v511, %v532
    %v549 = vsel %vm547, %v518, %v539
    %v550 = vsel %vm547, %v525, %v546
    %v551 = vld [vmem:[#allocation8] sm:$0xff]
    %v552 = vld [vmem:[#allocation8 + $0x8] sm:$0xff]
    %v553 = vld [vmem:[#allocation8 + $0x10] sm:$0xff]
    %v554 = vld [vmem:[#allocation8 + $0x18] sm:$0xff]
    %v555 = vld [vmem:[#allocation8 + $0x20] sm:$0xff]
    %v556 = vld [vmem:[#allocation8 + $0x28] sm:$0xff]
    %v557 = vld [vmem:[#allocation8 + $0x30] sm:$0xff]
    %v558 = vld [vmem:[#allocation8 + $0x38] sm:$0xff]
    %v559 = vld [vmem:[#allocation8 + $0x40] sm:$0xff]
    %v560 = vld [vmem:[#allocation8 + $0x48] sm:$0xff]
    %v561 = vld [vmem:[#allocation8 + $0x50] sm:$0xff]
    %v562 = vld [vmem:[#allocation8 + $0x58] sm:$0xff]
    %v563 = vld [vmem:[#allocation8 + $0x60] sm:$0xff]
    %v564 = vld [vmem:[#allocation8 + $0x68] sm:$0xff]
    %v565 = vld [vmem:[#allocation8 + $0x70] sm:$0xff]
    %v566 = vld [vmem:[#allocation8 + $0x78] sm:$0xff]
    %v567 = vld [vmem:[#allocation8 + $0x80] sm:$0xff]
    %v568 = vld [vmem:[#allocation8 + $0x88] sm:$0xff]
    %v569 = vld [vmem:[#allocation8 + $0x90] sm:$0xff]
    %v570 = vld [vmem:[#allocation8 + $0x98] sm:$0xff]
    %v571 = vld [vmem:[#allocation8 + $0xa0] sm:$0xff]
    %v572 = vld [vmem:[#allocation8 + $0xa8] sm:$0xff]
    %v573 = vld [vmem:[#allocation8 + $0xb0] sm:$0xff]
    %v574 = vld [vmem:[#allocation8 + $0xb8] sm:$0xff]
    %v575 = vld [vmem:[#allocation8 + $0xc0] sm:$0xff]
    %v576 = vld [vmem:[#allocation8 + $0xc8] sm:$0xff]
    %v577 = vld [vmem:[#allocation8 + $0xd0] sm:$0xff]
    %v578 = vld [vmem:[#allocation8 + $0xd8] sm:$0xff]
    %v579 = vld [vmem:[#allocation8 + $0xe0] sm:$0xff]
    %v580 = vld [vmem:[#allocation8 + $0xe8] sm:$0xff]
    %v581 = vld [vmem:[#allocation8 + $0xf0] sm:$0xff]
    %v582 = vld [vmem:[#allocation8 + $0xf8] sm:$0xff]
    %v583 = vld [vmem:[#allocation8 + $0x100] sm:$0xff]
    %v584 = vld [vmem:[#allocation8 + $0x108] sm:$0xff]
    %v585 = vld [vmem:[#allocation8 + $0x110] sm:$0xff]
    %v586 = vld [vmem:[#allocation8 + $0x118] sm:$0xff]
    %v587 = vld [vmem:[#allocation8 + $0x120] sm:$0xff]
    %v588 = vld [vmem:[#allocation8 + $0x128] sm:$0xff]
    %v589 = vld [vmem:[#allocation8 + $0x130] sm:$0xff]
    %v590 = vld [vmem:[#allocation8 + $0x138] sm:$0xff]
    %v591 = vld [vmem:[#allocation8 + $0x140] sm:$0xff]
    %v592 = vld [vmem:[#allocation8 + $0x148] sm:$0xff]
    %v593 = vld [vmem:[#allocation8 + $0x150] sm:$0xff]
    %v594 = vld [vmem:[#allocation8 + $0x158] sm:$0xff]
    %v595 = vld [vmem:[#allocation8 + $0x160] sm:$0xff]
    %v596 = vld [vmem:[#allocation8 + $0x168] sm:$0xff]
    %v597 = vld [vmem:[#allocation8 + $0x170] sm:$0xff]
    %v598 = vld [vmem:[#allocation8 + $0x178] sm:$0xff]
    %v599 = vld [vmem:[%s6] sm:$0x1]
    %v601 = vlaneseq
    %v602 = vshrl.u32 %v601, 7
    %v603 = vsub.s32 0, %v602
    %v604 = vrot.slane %v599, %v603
    %606 = vmatprep.subr.mxu0 0.0
    %607 = vmatpush1.msra.mxu0 %v551
    %608 = vmatprep.subr.mxu0 0.0
    %609 = vmatpush1.msra.mxu0 %v552
    %610 = vmatprep.subr.mxu0 0.0
    %611 = vmatpush1.msra.mxu0 %v553
    %612 = vmatprep.subr.mxu0 0.0
    %613 = vmatpush1.msra.mxu0 %v554
    %614 = vmatprep.subr.mxu0 0.0
    %615 = vmatpush1.msra.mxu0 %v555
    %616 = vmatprep.subr.mxu0 0.0
    %617 = vmatpush1.msra.mxu0 %v556
    %618 = vmatprep.subr.mxu0 0.0
    %619 = vmatpush1.msra.mxu0 %v557
    %620 = vmatprep.subr.mxu0 0.0
    %621 = vmatpush1.msra.mxu0 %v558
    %622 = vmatprep.subr.mxu0 0.0
    %623 = vmatpush1.msra.mxu0 %v559
    %624 = vmatprep.subr.mxu0 0.0
    %625 = vmatpush1.msra.mxu0 %v560
    %626 = vmatprep.subr.mxu0 0.0
    %627 = vmatpush1.msra.mxu0 %v561
    %628 = vmatprep.subr.mxu0 0.0
    %629 = vmatpush1.msra.mxu0 %v562
    %630 = vmatprep.subr.mxu0 0.0
    %631 = vmatpush1.msra.mxu0 %v563
    %632 = vmatprep.subr.mxu0 0.0
    %633 = vmatpush1.msra.mxu0 %v564
    %634 = vmatprep.subr.mxu0 0.0
    %635 = vmatpush1.msra.mxu0 %v565
    %636 = vmatprep.subr.mxu0 0.0
    %637 = vmatpush1.msra.mxu0 %v566
    %638 = vmatprep.subr.mxu0 0.0
    %639 = vmatpush1.msra.mxu0 %v567
    %640 = vmatprep.subr.mxu0 0.0
    %641 = vmatpush1.msra.mxu0 %v568
    %642 = vmatprep.subr.mxu0 0.0
    %643 = vmatpush1.msra.mxu0 %v569
    %644 = vmatprep.subr.mxu0 0.0
    %645 = vmatpush1.msra.mxu0 %v570
    %646 = vmatprep.subr.mxu0 0.0
    %647 = vmatpush1.msra.mxu0 %v571
    %648 = vmatprep.subr.mxu0 0.0
    %649 = vmatpush1.msra.mxu0 %v572
    %650 = vmatprep.subr.mxu0 0.0
    %651 = vmatpush1.msra.mxu0 %v573
    %652 = vmatprep.subr.mxu0 0.0
    %653 = vmatpush1.msra.mxu0 %v574
    %654 = vmatprep.subr.mxu0 0.0
    %655 = vmatpush1.msra.mxu0 %v575
    %656 = vmatprep.subr.mxu0 0.0
    %657 = vmatpush1.msra.mxu0 %v576
    %658 = vmatprep.subr.mxu0 0.0
    %659 = vmatpush1.msra.mxu0 %v577
    %660 = vmatprep.subr.mxu0 0.0
    %661 = vmatpush1.msra.mxu0 %v578
    %662 = vmatprep.subr.mxu0 0.0
    %663 = vmatpush1.msra.mxu0 %v579
    %664 = vmatprep.subr.mxu0 0.0
    %665 = vmatpush1.msra.mxu0 %v580
    %666 = vmatprep.subr.mxu0 0.0
    %667 = vmatpush1.msra.mxu0 %v581
    %668 = vmatprep.subr.mxu0 0.0
    %669 = vmatpush1.msra.mxu0 %v582
    %670 = vmatprep.mubr.f32.mxu0 %v549
    %671 = vmatmul.mubr.f32.gmra.mrb[0].mxu0 %v548
    %v672 = vpop.f32.mrb[0].mxu0
    %v673 = vadd.f32 %v604, %v672
    %v674 = vpop.f32.mrb[0].mxu0
    %675 = vdwg.mxu0
    %676 = vmatprep.subr.mxu0 0.0
    %677 = vmatpush1.msra.mxu0 %v583
    %678 = vmatprep.subr.mxu0 0.0
    %679 = vmatpush1.msra.mxu0 %v584
    %680 = vmatprep.subr.mxu0 0.0
    %681 = vmatpush1.msra.mxu0 %v585
    %682 = vmatprep.subr.mxu0 0.0
    %683 = vmatpush1.msra.mxu0 %v586
    %684 = vmatprep.subr.mxu0 0.0
    %685 = vmatpush1.msra.mxu0 %v587
    %686 = vmatprep.subr.mxu0 0.0
    %687 = vmatpush1.msra.mxu0 %v588
    %688 = vmatprep.subr.mxu0 0.0
    %689 = vmatpush1.msra.mxu0 %v589
    %690 = vmatprep.subr.mxu0 0.0
    %691 = vmatpush1.msra.mxu0 %v590
    %692 = vmatprep.subr.mxu0 0.0
    %693 = vmatpush1.msra.mxu0 %v591
    %694 = vmatprep.subr.mxu0 0.0
    %695 = vmatpush1.msra.mxu0 %v592
    %696 = vmatprep.subr.mxu0 0.0
    %697 = vmatpush1.msra.mxu0 %v593
    %698 = vmatprep.subr.mxu0 0.0
    %699 = vmatpush1.msra.mxu0 %v594
    %700 = vmatprep.subr.mxu0 0.0
    %701 = vmatpush1.msra.mxu0 %v595
    %702 = vmatprep.subr.mxu0 0.0
    %703 = vmatpush1.msra.mxu0 %v596
    %704 = vmatprep.subr.mxu0 0.0
    %705 = vmatpush1.msra.mxu0 %v597
    %706 = vmatprep.subr.mxu0 0.0
    %707 = vmatpush1.msra.mxu0 %v598
    %708 = vmatprep.subr.mxu0 0.0
    %709 = vmatpush1.msra.mxu0 0.0
    %710 = vmatprep.subr.mxu0 0.0
    %711 = vmatpush1.msra.mxu0 0.0
    %712 = vmatprep.subr.mxu0 0.0
    %713 = vmatpush1.msra.mxu0 0.0
    %714 = vmatprep.subr.mxu0 0.0
    %715 = vmatpush1.msra.mxu0 0.0
    %716 = vmatprep.subr.mxu0 0.0
    %717 = vmatpush1.msra.mxu0 0.0
    %718 = vmatprep.subr.mxu0 0.0
    %719 = vmatpush1.msra.mxu0 0.0
    %720 = vmatprep.subr.mxu0 0.0
    %721 = vmatpush1.msra.mxu0 0.0
    %722 = vmatprep.subr.mxu0 0.0
    %723 = vmatpush1.msra.mxu0 0.0
    %724 = vmatprep.subr.mxu0 0.0
    %725 = vmatpush1.msra.mxu0 0.0
    %726 = vmatprep.subr.mxu0 0.0
    %727 = vmatpush1.msra.mxu0 0.0
    %728 = vmatprep.subr.mxu0 0.0
    %729 = vmatpush1.msra.mxu0 0.0
    %730 = vmatprep.subr.mxu0 0.0
    %731 = vmatpush1.msra.mxu0 0.0
    %732 = vmatprep.subr.mxu0 0.0
    %733 = vmatpush1.msra.mxu0 0.0
    %734 = vmatprep.subr.mxu0 0.0
    %735 = vmatpush1.msra.mxu0 0.0
    %736 = vmatprep.subr.mxu0 0.0
    %737 = vmatpush1.msra.mxu0 0.0
    %738 = vmatprep.subr.mxu0 0.0
    %739 = vmatpush1.msra.mxu0 0.0
    %740 = vmatprep.mubr.f32.mxu0 0.0
    %741 = vmatmul.mubr.f32.gmra.mrb[0].mxu0 %v550
    %v742 = vpop.f32.mrb[0].mxu0
    %v743 = vadd.f32 %v673, %v742
    %v744 = vpop.f32.mrb[0].mxu0
    %745 = vdwg.mxu0
    %v746 = vmax.f32 %v743, 0.0
    %v747 = vld [vmem:[%s7] sm:$0xff]
    %v748 = vld [vmem:[%s7 + $0x8] sm:$0xff]
    %v749 = vld [vmem:[%s7 + $0x10] sm:$0xff]
    %v750 = vld [vmem:[%s7 + $0x18] sm:$0xff]
    %v751 = vld [vmem:[%s7 + $0x20] sm:$0xff]
    %v752 = vld [vmem:[%s7 + $0x28] sm:$0xff]
    %v753 = vld [vmem:[%s7 + $0x30] sm:$0xff]
    %v754 = vld [vmem:[%s7 + $0x38] sm:$0xff]
    %v755 = vld [vmem:[%s7 + $0x40] sm:$0xff]
    %v756 = vld [vmem:[%s7 + $0x48] sm:$0xff]
    %v757 = vld [vmem:[%s7 + $0x50] sm:$0xff]
    %v758 = vld [vmem:[%s7 + $0x58] sm:$0xff]
    %v759 = vld [vmem:[%s7 + $0x60] sm:$0xff]
    %v760 = vld [vmem:[%s7 + $0x68] sm:$0xff]
    %v761 = vld [vmem:[%s7 + $0x70] sm:$0xff]
    %v762 = vld [vmem:[%s7 + $0x78] sm:$0xff]
    %v763 = vld [vmem:[%s8] sm:$0x1]
    %v765 = vlaneseq
    %v766 = vshrl.u32 %v765, 7
    %v767 = vsub.s32 0, %v766
    %v768 = vrot.slane %v763, %v767
    %770 = vmatprep.subr.mxu0 0.0
    %771 = vmatpush1.msra.mxu0 %v747
    %772 = vmatprep.subr.mxu0 0.0
    %773 = vmatpush1.msra.mxu0 %v748
    %774 = vmatprep.subr.mxu0 0.0
    %775 = vmatpush1.msra.mxu0 %v749
    %776 = vmatprep.subr.mxu0 0.0
    %777 = vmatpush1.msra.mxu0 %v750
    %778 = vmatprep.subr.mxu0 0.0
    %779 = vmatpush1.msra.mxu0 %v751
    %780 = vmatprep.subr.mxu0 0.0
    %781 = vmatpush1.msra.mxu0 %v752
    %782 = vmatprep.subr.mxu0 0.0
    %783 = vmatpush1.msra.mxu0 %v753
    %784 = vmatprep.subr.mxu0 0.0
    %785 = vmatpush1.msra.mxu0 %v754
    %786 = vmatprep.subr.mxu0 0.0
    %787 = vmatpush1.msra.mxu0 %v755
    %788 = vmatprep.subr.mxu0 0.0
    %789 = vmatpush1.msra.mxu0 %v756
    %790 = vmatprep.subr.mxu0 0.0
    %791 = vmatpush1.msra.mxu0 %v757
    %792 = vmatprep.subr.mxu0 0.0
    %793 = vmatpush1.msra.mxu0 %v758
    %794 = vmatprep.subr.mxu0 0.0
    %795 = vmatpush1.msra.mxu0 %v759
    %796 = vmatprep.subr.mxu0 0.0
    %797 = vmatpush1.msra.mxu0 %v760
    %798 = vmatprep.subr.mxu0 0.0
    %799 = vmatpush1.msra.mxu0 %v761
    %800 = vmatprep.subr.mxu0 0.0
    %801 = vmatpush1.msra.mxu0 %v762
    %802 = vmatprep.subr.mxu0 0.0
    %803 = vmatpush1.msra.mxu0 0.0
    %804 = vmatprep.subr.mxu0 0.0
    %805 = vmatpush1.msra.mxu0 0.0
    %806 = vmatprep.subr.mxu0 0.0
    %807 = vmatpush1.msra.mxu0 0.0
    %808 = vmatprep.subr.mxu0 0.0
    %809 = vmatpush1.msra.mxu0 0.0
    %810 = vmatprep.subr.mxu0 0.0
    %811 = vmatpush1.msra.mxu0 0.0
    %812 = vmatprep.subr.mxu0 0.0
    %813 = vmatpush1.msra.mxu0 0.0
    %814 = vmatprep.subr.mxu0 0.0
    %815 = vmatpush1.msra.mxu0 0.0
    %816 = vmatprep.subr.mxu0 0.0
    %817 = vmatpush1.msra.mxu0 0.0
    %818 = vmatprep.subr.mxu0 0.0
    %819 = vmatpush1.msra.mxu0 0.0
    %820 = vmatprep.subr.mxu0 0.0
    %821 = vmatpush1.msra.mxu0 0.0
    %822 = vmatprep.subr.mxu0 0.0
    %823 = vmatpush1.msra.mxu0 0.0
    %824 = vmatprep.subr.mxu0 0.0
    %825 = vmatpush1.msra.mxu0 0.0
    %826 = vmatprep.subr.mxu0 0.0
    %827 = vmatpush1.msra.mxu0 0.0
    %828 = vmatprep.subr.mxu0 0.0
    %829 = vmatpush1.msra.mxu0 0.0
    %830 = vmatprep.subr.mxu0 0.0
    %831 = vmatpush1.msra.mxu0 0.0
    %832 = vmatprep.subr.mxu0 0.0
    %833 = vmatpush1.msra.mxu0 0.0
    %834 = vmatprep.mubr.f32.mxu0 0.0
    %835 = vmatmul.mubr.f32.gmra.mrb[0].mxu0 %v746
    %v836 = vpop.f32.mrb[0].mxu0
    %v837 = vadd.f32 %v768, %v836
    %v838 = vpop.f32.mrb[0].mxu0
    %839 = vdwg.mxu0
    %840 = vst [vmem:[#allocation9] sm:$0x3] %v837
    // Predicated region
    $region50: #{forward.1} parent=1 // pred_check
      _
    $region51: #{forward.1} parent=1 // pred_check_branch
      %842 = sbr.rel (0) target = $region53
    $region52: #{forward.1} parent=1 // pred_region
      %s844 = ssub.s32 32, 32
      %845 = vsyncadd [#allocation5], %s844
      %s847 = sshll.u32 [#allocation9], 4
      %s848 = int_to_ptr.vmem [resolvable:$true] %s847
      %850 = dma.vmem_to_hbm [thread:$0]  %s848, 32, %s9, [#allocation5]
    $region53: #{forward.1} parent=1 // pred_fallthru
      _
    // Predicated region
    $region54: #{forward.1} parent=1 // pred_check
      _
    $region55: #{forward.1} parent=1 // pred_check_branch
      %852 = sbr.rel (0) target = $region57
    $region56: #{forward.1} parent=1 // pred_region
      %853 = dma.done [#allocation5], 32
    $region57: #{forward.1} parent=1 // pred_fallthru
      _
    %854 = vsyncpa [#allocation4], 1
    %855 = vsyncpa [#allocation7], 1
    %856 = vsyncpa [#allocation5], 1

</llo_original>
